<compile_context>
chip_gen: v6e
topology: v6e:2x2x1
jax: 0.10.0
libtpu: 0.0.40
codegen_flags: <defaults>
</compile_context>

<pallas_src>
import jax
import jax.numpy as jnp
from jax import lax
from jax.experimental import pallas as pl
from jax.experimental.pallas import tpu as pltpu

INPUT_SIZE = 1
HIDDEN_SIZE = 16
OUTPUT_SIZE = 1
SEQ_LEN = 8  # small example sequence length

# Rows of the packed (8, H) parameter slab (single HBM->VMEM DMA, static row slices).
_ROW_H0 = 0
_ROW_WIH = 1
_ROW_BIAS = 2
_ROW_WLIN = 3
_PACK_ROWS = 8  # pad to a full sublane tile

# Intentional precision choice (see header): DEFAULT = bf16-pass MXU, lowest per-step
# latency on the serial recurrence; HIGHEST only if bit parity with fp32 PyTorch is
# required (adds MXU passes on the critical path).
_MATMUL_PRECISION = lax.Precision.DEFAULT


def rnn_kernel(x_ref, packed_ref, whh_t_ref, blin_ref, out_ref, hN_ref, hs_scratch):
    """Single-program kernel: full tanh-RNN recurrence + output projection.

    x_ref:      (T, 1)   VMEM  input sequence (batch squeezed)
    packed_ref: (8, H)   VMEM  rows: [h0, W_ih^T, b_ih+b_hh, W_lin, 0, 0, 0, 0]
    whh_t_ref:  (H, H)   VMEM  W_hh^T
    blin_ref:   (1,)     SMEM  b_lin scalar
    out_ref:    (1, T)   VMEM  lane-dense per-step linear outputs
    hN_ref:     (1, H)   VMEM  final hidden state
    hs_scratch: (T, H)   VMEM  all hidden states (for the batched projection)
    """
    seq_len = x_ref.shape[0]

    # One load of the packed parameter slab; static row slices are free.
    packed = packed_ref[...]
    h = packed[_ROW_H0:_ROW_H0 + 1, :]                  # (1, H) initial hidden
    wih_row = packed[_ROW_WIH:_ROW_WIH + 1, :]          # (1, H) == W_ih^T
    b = packed[_ROW_BIAS:_ROW_BIAS + 1, :]              # (1, H) == b_ih + b_hh
    wlin_row = packed[_ROW_WLIN:_ROW_WLIN + 1, :]       # (1, H) == W_lin

    # Hoisted input projection (pure VPU, done once): (T,1)*(1,H) + (1,H) -> (T,H).
    xb = x_ref[...] * wih_row + b

    # Pre-extract the per-step rows; they are h-independent, so the sublane
    # selects are explicitly off the serial MXU -> add -> tanh chain.
    xb_rows = [xb[t:t + 1, :] for t in range(seq_len)]

    whh_t = whh_t_ref[...]  # load weights once, reuse across unrolled steps

    # Static-length recurrence, fully unrolled.  Only h @ W_hh^T (MXU) + add + tanh
    # remain on the serial critical path per step.
    # TODO(synk): A/B-benchmark a VPU+XLU formulation of this dot per chip generation.
    for t in range(seq_len):
        h = jnp.tanh(xb_rows[t] +
                     jnp.dot(h, whh_t,
                             preferred_element_type=jnp.float32,
                             precision=_MATMUL_PRECISION))
        hs_scratch[t:t + 1, :] = h  # static-slice store, off the critical path

    hN_ref[...] = h.astype(hN_ref.dtype)

    # Lane-dense output projection over all timesteps at once: contract W_lin (1,H)
    # with hs (T,H) over H directly -> (1,T), no explicit transpose of the slab.
    out_row = lax.dot_general(
        wlin_row, hs_scratch[...],
        dimension_numbers=(((1,), (1,)), ((), ())),
        preferred_element_type=jnp.float32,
        precision=_MATMUL_PRECISION)
    out_ref[...] = (out_row + blin_ref[0]).astype(out_ref.dtype)


def net_forward(x, hidden_prev, params):
    """Mirrors Net.forward(x, hidden_prev).

    x:           (1, T, input_size)   (batch_first; batch must be 1)
    hidden_prev: (1, 1, H)
    returns: out (1, T, output_size), hidden_next (1, 1, H)
    """
    # TODO(synk): original PyTorch Net accepts arbitrary batch; this wrapper is B == 1.
    assert x.shape[0] == 1 and x.shape[2] == INPUT_SIZE
    T = x.shape[1]

    x2d = x.reshape(T, INPUT_SIZE).astype(jnp.float32)

    # Pack the four small parameter rows into one (8, H) slab -> a single input DMA.
    h0_row = hidden_prev.reshape(1, HIDDEN_SIZE).astype(jnp.float32)
    wih_row = params["w_ih"].T.reshape(1, HIDDEN_SIZE)                 # W_ih^T
    b_row = (params["b_ih"] + params["b_hh"]).reshape(1, HIDDEN_SIZE)  # b_ih + b_hh
    wlin_row = params["w_lin"].reshape(1, HIDDEN_SIZE)                 # W_lin
    packed = jnp.concatenate(
        [h0_row, wih_row, b_row, wlin_row,
         jnp.zeros((_PACK_ROWS - 4, HIDDEN_SIZE), jnp.float32)], axis=0)

    whh_t = params["w_hh"].T.astype(jnp.float32)                       # (H, H) == W_hh^T
    blin = params["b_lin"].reshape(OUTPUT_SIZE).astype(jnp.float32)    # (1,) scalar

    vmem = pl.BlockSpec(memory_space=pltpu.MemorySpace.VMEM)
    smem = pl.BlockSpec(memory_space=pltpu.MemorySpace.SMEM)

    out_row, h_final = pl.pallas_call(
        rnn_kernel,
        out_shape=(
            jax.ShapeDtypeStruct((1, T), jnp.float32),           # lane-dense outputs
            jax.ShapeDtypeStruct((1, HIDDEN_SIZE), jnp.float32),
        ),
        in_specs=[vmem, vmem, vmem, smem],
        out_specs=(vmem, vmem),
        scratch_shapes=[pltpu.VMEM((T, HIDDEN_SIZE), jnp.float32)],
    )(x2d, packed, whh_t, blin)

    # out.view(-1, H) -> linear -> unsqueeze(0)  =>  (1, B*T, output_size)
    out = out_row.reshape(1, T, OUTPUT_SIZE)
    hidden_next = h_final.reshape(1, 1, HIDDEN_SIZE)
    return out, hidden_next


def init_params(key):
    """Deterministic parameter init mirroring the module's shapes.

    RNN params: normal(mean=0, std=0.001) as in the PyTorch __init__.
    Linear params: small deterministic values (synthetic, not a checkpoint).
    """
    k1, k2, k3, k4, k5, k6 = jax.random.split(key, 6)
    std = 0.001
    params = {
        "w_ih": std * jax.random.normal(k1, (HIDDEN_SIZE, INPUT_SIZE), jnp.float32),
        "w_hh": std * jax.random.normal(k2, (HIDDEN_SIZE, HIDDEN_SIZE), jnp.float32),
        "b_ih": std * jax.random.normal(k3, (HIDDEN_SIZE,), jnp.float32),
        "b_hh": std * jax.random.normal(k4, (HIDDEN_SIZE,), jnp.float32),
        "w_lin": (1.0 / jnp.sqrt(HIDDEN_SIZE))
                 * jax.random.uniform(k5, (OUTPUT_SIZE, HIDDEN_SIZE), jnp.float32,
                                      minval=-1.0, maxval=1.0),
        "b_lin": (1.0 / jnp.sqrt(HIDDEN_SIZE))
                 * jax.random.uniform(k6, (OUTPUT_SIZE,), jnp.float32,
                                      minval=-1.0, maxval=1.0),
    }
    return params


def reference_forward(x, hidden_prev, params):
    """Pure-JAX reference of the same forward pass (same matmul precision)."""
    T = x.shape[1]
    h = hidden_prev.reshape(1, HIDDEN_SIZE)
    hs = []
    for t in range(T):
        x_t = x[0, t:t + 1, :]                                         # (1, input)
        h = jnp.tanh(jnp.dot(x_t, params["w_ih"].T, precision=_MATMUL_PRECISION)
                     + params["b_ih"]
                     + jnp.dot(h, params["w_hh"].T, precision=_MATMUL_PRECISION)
                     + params["b_hh"])
        hs.append(h)
    hs = jnp.concatenate(hs, axis=0)                                   # (T, H)
    out = (jnp.dot(hs, params["w_lin"].T, precision=_MATMUL_PRECISION)
           + params["b_lin"])                                          # (T, 1)
    return out.reshape(1, T, OUTPUT_SIZE), h.reshape(1, 1, HIDDEN_SIZE)


if __name__ == "__main__":
    key = jax.random.PRNGKey(0)
    kx, kp = jax.random.split(key)

    params = init_params(kp)
    x = jax.random.normal(kx, (1, SEQ_LEN, INPUT_SIZE), jnp.float32)
    hidden_prev = jnp.zeros((1, 1, HIDDEN_SIZE), jnp.float32)

    out, hidden_next = net_forward(x, hidden_prev, params)
    out = jax.block_until_ready(out)
    hidden_next = jax.block_until_ready(hidden_next)

    # sanity check against pure-JAX reference
    out_ref, hidden_ref = reference_forward(x, hidden_prev, params)
    assert out.shape == (1, SEQ_LEN, OUTPUT_SIZE)
    assert hidden_next.shape == (1, 1, HIDDEN_SIZE)
    assert jnp.allclose(out, out_ref, atol=1e-5), "output mismatch"
    assert jnp.allclose(hidden_next, hidden_ref, atol=1e-5), "hidden mismatch"

    print("KERNEL_OK")
</pallas_src>

<mosaic_0001>
module attributes {stable_mosaic.version = 11 : i64} {
  func.func @rnn_kernel(%arg0: memref<8x1xf32, #tpu.memory_space<vmem>>, %arg1: memref<8x16xf32, #tpu.memory_space<vmem>>, %arg2: memref<16x16xf32, #tpu.memory_space<vmem>>, %arg3: memref<1xf32, #tpu.memory_space<smem>>, %arg4: memref<1x8xf32, #tpu.memory_space<vmem>>, %arg5: memref<1x16xf32, #tpu.memory_space<vmem>>, %arg6: memref<8x16xf32, #tpu.memory_space<vmem>>) attributes {dimension_semantics = [], scalar_prefetch = 0 : i64, scratch_operands = 1 : i64, tpu.core_type = #tpu.core_type<tc>} {
    %c0 = arith.constant 0 : index
    %c0_0 = arith.constant 0 : index
    %0 = vector.load %arg1[%c0, %c0_0] : memref<8x16xf32, #tpu.memory_space<vmem>>, vector<8x16xf32>
    %1 = vector.extract_strided_slice %0 {offsets = [0, 0], sizes = [1, 16], strides = [1, 1]} : vector<8x16xf32> to vector<1x16xf32>
    %2 = vector.extract_strided_slice %0 {offsets = [1, 0], sizes = [1, 16], strides = [1, 1]} : vector<8x16xf32> to vector<1x16xf32>
    %3 = vector.extract_strided_slice %0 {offsets = [2, 0], sizes = [1, 16], strides = [1, 1]} : vector<8x16xf32> to vector<1x16xf32>
    %4 = vector.extract_strided_slice %0 {offsets = [3, 0], sizes = [1, 16], strides = [1, 1]} : vector<8x16xf32> to vector<1x16xf32>
    %c0_1 = arith.constant 0 : index
    %c0_2 = arith.constant 0 : index
    %5 = vector.load %arg0[%c0_1, %c0_2] : memref<8x1xf32, #tpu.memory_space<vmem>>, vector<8x1xf32>
    %6 = vector.broadcast %5 : vector<8x1xf32> to vector<8x16xf32>
    %7 = vector.broadcast %2 : vector<1x16xf32> to vector<8x16xf32>
    %8 = arith.mulf %6, %7 : vector<8x16xf32>
    %9 = vector.broadcast %3 : vector<1x16xf32> to vector<8x16xf32>
    %10 = arith.addf %8, %9 : vector<8x16xf32>
    %11 = vector.extract_strided_slice %10 {offsets = [0, 0], sizes = [1, 16], strides = [1, 1]} : vector<8x16xf32> to vector<1x16xf32>
    %12 = vector.extract_strided_slice %10 {offsets = [1, 0], sizes = [1, 16], strides = [1, 1]} : vector<8x16xf32> to vector<1x16xf32>
    %13 = vector.extract_strided_slice %10 {offsets = [2, 0], sizes = [1, 16], strides = [1, 1]} : vector<8x16xf32> to vector<1x16xf32>
    %14 = vector.extract_strided_slice %10 {offsets = [3, 0], sizes = [1, 16], strides = [1, 1]} : vector<8x16xf32> to vector<1x16xf32>
    %15 = vector.extract_strided_slice %10 {offsets = [4, 0], sizes = [1, 16], strides = [1, 1]} : vector<8x16xf32> to vector<1x16xf32>
    %16 = vector.extract_strided_slice %10 {offsets = [5, 0], sizes = [1, 16], strides = [1, 1]} : vector<8x16xf32> to vector<1x16xf32>
    %17 = vector.extract_strided_slice %10 {offsets = [6, 0], sizes = [1, 16], strides = [1, 1]} : vector<8x16xf32> to vector<1x16xf32>
    %18 = vector.extract_strided_slice %10 {offsets = [7, 0], sizes = [1, 16], strides = [1, 1]} : vector<8x16xf32> to vector<1x16xf32>
    %c0_3 = arith.constant 0 : index
    %c0_4 = arith.constant 0 : index
    %19 = vector.load %arg2[%c0_3, %c0_4] : memref<16x16xf32, #tpu.memory_space<vmem>>, vector<16x16xf32>
    %cst = arith.constant dense<0.000000e+00> : vector<1x16xf32>
    %20 = tpu.matmul %1, %19, %cst {dimension_numbers = #tpu.dot_dimension_numbers<[1], [0], [0], [1], [0, 0, 1, 1], [], []>} : vector<1x16xf32>, vector<16x16xf32>, vector<1x16xf32> -> vector<1x16xf32>
    %21 = arith.addf %11, %20 : vector<1x16xf32>
    %22 = math.tanh %21 : vector<1x16xf32>
    %c0_5 = arith.constant 0 : index
    %c0_6 = arith.constant 0 : index
    %23 = vector.load %arg6[%c0_5, %c0_6] : memref<8x16xf32, #tpu.memory_space<vmem>>, vector<1x16xf32>
    tpu.vector_store %arg6[%c0_5, %c0_6], %22 {strides = array<i32>} : memref<8x16xf32, #tpu.memory_space<vmem>>, vector<1x16xf32>,
    %cst_7 = arith.constant dense<0.000000e+00> : vector<1x16xf32>
    %24 = tpu.matmul %22, %19, %cst_7 {dimension_numbers = #tpu.dot_dimension_numbers<[1], [0], [0], [1], [0, 0, 1, 1], [], []>} : vector<1x16xf32>, vector<16x16xf32>, vector<1x16xf32> -> vector<1x16xf32>
    %25 = arith.addf %12, %24 : vector<1x16xf32>
    %26 = math.tanh %25 : vector<1x16xf32>
    %c1 = arith.constant 1 : index
    %c0_8 = arith.constant 0 : index
    %27 = vector.load %arg6[%c1, %c0_8] : memref<8x16xf32, #tpu.memory_space<vmem>>, vector<1x16xf32>
    tpu.vector_store %arg6[%c1, %c0_8], %26 {strides = array<i32>} : memref<8x16xf32, #tpu.memory_space<vmem>>, vector<1x16xf32>,
    %cst_9 = arith.constant dense<0.000000e+00> : vector<1x16xf32>
    %28 = tpu.matmul %26, %19, %cst_9 {dimension_numbers = #tpu.dot_dimension_numbers<[1], [0], [0], [1], [0, 0, 1, 1], [], []>} : vector<1x16xf32>, vector<16x16xf32>, vector<1x16xf32> -> vector<1x16xf32>
    %29 = arith.addf %13, %28 : vector<1x16xf32>
    %30 = math.tanh %29 : vector<1x16xf32>
    %c2 = arith.constant 2 : index
    %c0_10 = arith.constant 0 : index
    %31 = vector.load %arg6[%c2, %c0_10] : memref<8x16xf32, #tpu.memory_space<vmem>>, vector<1x16xf32>
    tpu.vector_store %arg6[%c2, %c0_10], %30 {strides = array<i32>} : memref<8x16xf32, #tpu.memory_space<vmem>>, vector<1x16xf32>,
    %cst_11 = arith.constant dense<0.000000e+00> : vector<1x16xf32>
    %32 = tpu.matmul %30, %19, %cst_11 {dimension_numbers = #tpu.dot_dimension_numbers<[1], [0], [0], [1], [0, 0, 1, 1], [], []>} : vector<1x16xf32>, vector<16x16xf32>, vector<1x16xf32> -> vector<1x16xf32>
    %33 = arith.addf %14, %32 : vector<1x16xf32>
    %34 = math.tanh %33 : vector<1x16xf32>
    %c3 = arith.constant 3 : index
    %c0_12 = arith.constant 0 : index
    %35 = vector.load %arg6[%c3, %c0_12] : memref<8x16xf32, #tpu.memory_space<vmem>>, vector<1x16xf32>
    tpu.vector_store %arg6[%c3, %c0_12], %34 {strides = array<i32>} : memref<8x16xf32, #tpu.memory_space<vmem>>, vector<1x16xf32>,
    %cst_13 = arith.constant dense<0.000000e+00> : vector<1x16xf32>
    %36 = tpu.matmul %34, %19, %cst_13 {dimension_numbers = #tpu.dot_dimension_numbers<[1], [0], [0], [1], [0, 0, 1, 1], [], []>} : vector<1x16xf32>, vector<16x16xf32>, vector<1x16xf32> -> vector<1x16xf32>
    %37 = arith.addf %15, %36 : vector<1x16xf32>
    %38 = math.tanh %37 : vector<1x16xf32>
    %c4 = arith.constant 4 : index
    %c0_14 = arith.constant 0 : index
    %39 = vector.load %arg6[%c4, %c0_14] : memref<8x16xf32, #tpu.memory_space<vmem>>, vector<1x16xf32>
    tpu.vector_store %arg6[%c4, %c0_14], %38 {strides = array<i32>} : memref<8x16xf32, #tpu.memory_space<vmem>>, vector<1x16xf32>,
    %cst_15 = arith.constant dense<0.000000e+00> : vector<1x16xf32>
    %40 = tpu.matmul %38, %19, %cst_15 {dimension_numbers = #tpu.dot_dimension_numbers<[1], [0], [0], [1], [0, 0, 1, 1], [], []>} : vector<1x16xf32>, vector<16x16xf32>, vector<1x16xf32> -> vector<1x16xf32>
    %41 = arith.addf %16, %40 : vector<1x16xf32>
    %42 = math.tanh %41 : vector<1x16xf32>
    %c5 = arith.constant 5 : index
    %c0_16 = arith.constant 0 : index
    %43 = vector.load %arg6[%c5, %c0_16] : memref<8x16xf32, #tpu.memory_space<vmem>>, vector<1x16xf32>
    tpu.vector_store %arg6[%c5, %c0_16], %42 {strides = array<i32>} : memref<8x16xf32, #tpu.memory_space<vmem>>, vector<1x16xf32>,
    %cst_17 = arith.constant dense<0.000000e+00> : vector<1x16xf32>
    %44 = tpu.matmul %42, %19, %cst_17 {dimension_numbers = #tpu.dot_dimension_numbers<[1], [0], [0], [1], [0, 0, 1, 1], [], []>} : vector<1x16xf32>, vector<16x16xf32>, vector<1x16xf32> -> vector<1x16xf32>
    %45 = arith.addf %17, %44 : vector<1x16xf32>
    %46 = math.tanh %45 : vector<1x16xf32>
    %c6 = arith.constant 6 : index
    %c0_18 = arith.constant 0 : index
    %47 = vector.load %arg6[%c6, %c0_18] : memref<8x16xf32, #tpu.memory_space<vmem>>, vector<1x16xf32>
    tpu.vector_store %arg6[%c6, %c0_18], %46 {strides = array<i32>} : memref<8x16xf32, #tpu.memory_space<vmem>>, vector<1x16xf32>,
    %cst_19 = arith.constant dense<0.000000e+00> : vector<1x16xf32>
    %48 = tpu.matmul %46, %19, %cst_19 {dimension_numbers = #tpu.dot_dimension_numbers<[1], [0], [0], [1], [0, 0, 1, 1], [], []>} : vector<1x16xf32>, vector<16x16xf32>, vector<1x16xf32> -> vector<1x16xf32>
    %49 = arith.addf %18, %48 : vector<1x16xf32>
    %50 = math.tanh %49 : vector<1x16xf32>
    %c7 = arith.constant 7 : index
    %c0_20 = arith.constant 0 : index
    %51 = vector.load %arg6[%c7, %c0_20] : memref<8x16xf32, #tpu.memory_space<vmem>>, vector<1x16xf32>
    tpu.vector_store %arg6[%c7, %c0_20], %50 {strides = array<i32>} : memref<8x16xf32, #tpu.memory_space<vmem>>, vector<1x16xf32>,
    %c0_21 = arith.constant 0 : index
    %c0_22 = arith.constant 0 : index
    %52 = vector.load %arg5[%c0_21, %c0_22] : memref<1x16xf32, #tpu.memory_space<vmem>>, vector<1x16xf32>
    tpu.vector_store %arg5[%c0_21, %c0_22], %50 {strides = array<i32>} : memref<1x16xf32, #tpu.memory_space<vmem>>, vector<1x16xf32>,
    %c0_23 = arith.constant 0 : index
    %c0_24 = arith.constant 0 : index
    %53 = vector.load %arg6[%c0_23, %c0_24] : memref<8x16xf32, #tpu.memory_space<vmem>>, vector<8x16xf32>
    %cst_25 = arith.constant dense<0.000000e+00> : vector<1x8xf32>
    %54 = tpu.matmul %4, %53, %cst_25 {dimension_numbers = #tpu.dot_dimension_numbers<[1], [1], [0], [0], [0, 0, 1, 0], [], []>} : vector<1x16xf32>, vector<8x16xf32>, vector<1x8xf32> -> vector<1x8xf32>
    %c0_26 = arith.constant 0 : index
    %55 = memref.load %arg3[%c0_26] : memref<1xf32, #tpu.memory_space<smem>>
    %56 = vector.broadcast %55 : f32 to vector<1x8xf32>
    %57 = arith.addf %54, %56 : vector<1x8xf32>
    %c0_27 = arith.constant 0 : index
    %c0_28 = arith.constant 0 : index
    %58 = vector.load %arg4[%c0_27, %c0_28] : memref<1x8xf32, #tpu.memory_space<vmem>>, vector<1x8xf32>
    tpu.vector_store %arg4[%c0_27, %c0_28], %57 {strides = array<i32>} : memref<1x8xf32, #tpu.memory_space<vmem>>, vector<1x8xf32>,
    return
  }
}

</mosaic_0001>

<llo_original>
// kernel: tpu_custom_call.1
$region0: #{tpu_custom_call.1}
  #allocation0 [shape = 'u32[]', space=smem, size = 0x4, offset = 0x4, fixed_abs, tag = 'smem constant byte address 0x4 - core index']
  #allocation1 [shape = 'u32[144,128]{1,0:T(1,128)}', space=vmem, size = 0x12000, scoped, tag = 'internal scratch']
  #allocation2 [shape = 'f32[8,16]{1,0:T(8,128)}', space=vmem, size = 0x1000, scoped, tag = 'scratch operand']
  #allocation3 [shape = 'f32[1]{0:T(128)S(6)}', space=smem, size = 0x200, scoped, tag = 'scoped memory for tpu_custom_call.1']
  %s0 = inlined_call_operand.vmem [shape: f32[8,1], index: 0, kind: input, shape index: {}]
  %s1 = inlined_call_operand.vmem [shape: f32[8,16], index: 1, kind: input, shape index: {}]
  %s2 = inlined_call_operand.hbm [shape: f32[16,16], index: 2, kind: input, shape index: {}]
  %s3 = inlined_call_operand.<no memory space> [shape: f32[1], index: 3, kind: input, shape index: {}]
  %s4 = inlined_call_operand.hbm [shape: f32[1,8], index: 4, kind: output, shape index: {0}]
  %s5 = inlined_call_operand.hbm [shape: f32[1,16], index: 5, kind: output, shape index: {1}]
  %6 = xla_tuple %s4, %s5
  %s7 = sld [smem:[#allocation0]]
  $region38: #{tpu_custom_call.1} parent=0
    _
  %s9 = ssub.s32 1, %s7
  %s10 = scalar_select 0, %s9, %s7
  %11 = sst [smem:[#allocation3]] %s3
  $region1: #{tpu_custom_call.1} parent=0
    #allocation4 [shape = 'u8[8192]{0}', space=vmem, size = 0x2000, scoped, tag = 'input window, operand 2, single buffered']
    #allocation5 [shape = 's32[1]{0}', space=sflag, size = 0x4, scoped, tag = 'scoped memory for tpu_custom_call.1']
    #allocation6 [shape = 's32[1]{0}', space=sflag, size = 0x4, scoped, tag = 'scoped memory for tpu_custom_call.1']
    #allocation7 [shape = 'u8[512]{0}', space=vmem, size = 0x400, scoped, tag = 'output window, operand 0, single buffered']
    #allocation8 [shape = 'u8[512]{0}', space=vmem, size = 0x400, scoped, tag = 'output window, operand 1, single buffered']
    #allocation9 [shape = 's32[1]{0}', space=sflag, size = 0x4, scoped, tag = 'scoped memory for tpu_custom_call.1']
    %12 = vsyncpa [#allocation5], 0
    %13 = vsyncpa [#allocation6], 0
    %14 = vsyncpa [#allocation9], 0
    // Predicated region
    $region2: #{tpu_custom_call.1} parent=1 // pred_check
      _
    $region3: #{tpu_custom_call.1} parent=1 // pred_check_branch
      %16 = sbr.rel (0) target = $region5
    $region4: #{tpu_custom_call.1} parent=1 // pred_region
      _
    $region5: #{tpu_custom_call.1} parent=1 // pred_fallthru
      _
    // Predicated region
    $region6: #{tpu_custom_call.1} parent=1 // pred_check
      _
    $region7: #{tpu_custom_call.1} parent=1 // pred_check_branch
      %18 = sbr.rel (0) target = $region9
    $region8: #{tpu_custom_call.1} parent=1 // pred_region
      _
    $region9: #{tpu_custom_call.1} parent=1 // pred_fallthru
      _
    // Predicated region
    $region10: #{tpu_custom_call.1} parent=1 // pred_check
      _
    $region11: #{tpu_custom_call.1} parent=1 // pred_check_branch
      %20 = sbr.rel (0) target = $region13
    $region12: #{tpu_custom_call.1} parent=1 // pred_region
      %s22 = ssub.s32 256, 256
      %23 = vsyncadd [#allocation5], %s22
      %s24 = sshll.u32 [#allocation4], 4
      %s25 = int_to_ptr.vmem [resolvable:$true] %s24
      %30 = dma.hbm_to_vmem [thread:$0]  %s2, 256, %s25, [#allocation5], 128, 128, 8
    $region13: #{tpu_custom_call.1} parent=1 // pred_fallthru
      _
    // Predicated region
    $region14: #{tpu_custom_call.1} parent=1 // pred_check
      _
    $region15: #{tpu_custom_call.1} parent=1 // pred_check_branch
      %32 = sbr.rel (0) target = $region17
    $region16: #{tpu_custom_call.1} parent=1 // pred_region
      _
    $region17: #{tpu_custom_call.1} parent=1 // pred_fallthru
      _
    // Predicated region
    $region18: #{tpu_custom_call.1} parent=1 // pred_check
      _
    $region19: #{tpu_custom_call.1} parent=1 // pred_check_branch
      %34 = sbr.rel (0) target = $region21
    $region20: #{tpu_custom_call.1} parent=1 // pred_region
      %35 = dma.done [#allocation5], 256
    $region21: #{tpu_custom_call.1} parent=1 // pred_fallthru
      _
    %v36 = vld [vmem:[%s1] sm:$0xff]
    %v37 = vld [vmem:[%s0] sm:$0xff]
    %39 = vset.pattern.permute.xlu0 0
    %40 = vperm.xlu0 %39, %v37
    %v41 = vpop.permute.xlu0 %40
    %v43 = vlaneseq
    %v44 = vshrl.u32 %v43, 7
    %v45 = vsub.s32 1, %v44
    %v46 = vrot.slane %v36, %v45
    %v47 = vmul.f32 %v41, %v46
    %v48 = vlaneseq
    %v49 = vshrl.u32 %v48, 7
    %v50 = vsub.s32 2, %v49
    %v51 = vrot.slane %v36, %v50
    %v52 = vadd.f32 %v47, %v51
    %v53 = vld [vmem:[#allocation4] sm:$0xff]
    %v54 = vld [vmem:[#allocation4 + $0x8] sm:$0xff]
    %vm55 = vcmask 130048
    %v57 = vsel %vm55, %v36, 0
    %59 = vmatprep.subr.mxu0 0.0
    %60 = vmatpush1.msra.mxu0 0.0
    %61 = vmatprep.subr.mxu0 0.0
    %62 = vmatpush1.msra.mxu0 0.0
    %63 = vmatprep.subr.mxu0 0.0
    %64 = vmatpush1.msra.mxu0 0.0
    %65 = vmatprep.subr.mxu0 0.0
    %66 = vmatpush1.msra.mxu0 0.0
    %67 = vmatprep.subr.mxu0 0.0
    %68 = vmatpush1.msra.mxu0 0.0
    %69 = vmatprep.subr.mxu0 0.0
    %70 = vmatpush1.msra.mxu0 0.0
    %71 = vmatprep.subr.mxu0 0.0
    %72 = vmatpush1.msra.mxu0 0.0
    %73 = vmatprep.subr.mxu0 0.0
    %74 = vmatpush1.msra.mxu0 0.0
    %75 = vmatprep.subr.mxu0 0.0
    %76 = vmatpush1.msra.mxu0 0.0
    %77 = vmatprep.subr.mxu0 0.0
    %78 = vmatpush1.msra.mxu0 0.0
    %79 = vmatprep.subr.mxu0 0.0
    %80 = vmatpush1.msra.mxu0 0.0
    %81 = vmatprep.subr.mxu0 0.0
    %82 = vmatpush1.msra.mxu0 0.0
    %83 = vmatprep.subr.mxu0 0.0
    %84 = vmatpush1.msra.mxu0 0.0
    %85 = vmatprep.subr.mxu0 0.0
    %86 = vmatpush1.msra.mxu0 0.0
    %87 = vmatprep.subr.mxu0 0.0
    %88 = vmatpush1.msra.mxu0 %v54
    %89 = vmatprep.subr.mxu0 0.0
    %90 = vmatpush1.msra.mxu0 %v53
    %91 = vmatprep.subr.mxu0 0.0
    %92 = vmatpush2.msra.mxu0 0.0
    %93 = vmatprep.subr.mxu0 0.0
    %94 = vmatpush2.msra.mxu0 0.0
    %95 = vmatprep.subr.mxu0 0.0
    %96 = vmatpush2.msra.mxu0 0.0
    %97 = vmatprep.subr.mxu0 0.0
    %98 = vmatpush2.msra.mxu0 0.0
    %99 = vmatprep.subr.mxu0 0.0
    %100 = vmatpush2.msra.mxu0 0.0
    %101 = vmatprep.subr.mxu0 0.0
    %102 = vmatpush2.msra.mxu0 0.0
    %103 = vmatprep.subr.mxu0 0.0
    %104 = vmatpush2.msra.mxu0 0.0
    %105 = vmatprep.subr.mxu0 0.0
    %106 = vmatpush2.msra.mxu0 0.0
    %107 = vmatprep.subr.mxu0 0.0
    %108 = vmatpush2.msra.mxu0 0.0
    %109 = vmatprep.subr.mxu0 0.0
    %110 = vmatpush2.msra.mxu0 0.0
    %111 = vmatprep.subr.mxu0 0.0
    %112 = vmatpush2.msra.mxu0 0.0
    %113 = vmatprep.subr.mxu0 0.0
    %114 = vmatpush2.msra.mxu0 0.0
    %115 = vmatprep.subr.mxu0 0.0
    %116 = vmatpush2.msra.mxu0 0.0
    %117 = vmatprep.subr.mxu0 0.0
    %118 = vmatpush2.msra.mxu0 0.0
    %119 = vmatprep.subr.mxu0 0.0
    %120 = vmatpush2.msra.mxu0 0.0
    %121 = vmatprep.subr.mxu0 0.0
    %122 = vmatpush2.msra.mxu0 0.0
    %123 = vmatprep.mubr.f32.mxu0 0.0
    %124 = vmatmul.mubr.f32.gmra.mxu0 %v57
    %v125 = vpop.f32.mrf.mxu0
    %v126 = vadd.f32 0.0, %v125
    %v127 = vpop.f32.mrf.mxu0
    %128 = vdwg.mxu0
    %v129 = vadd.f32 %v52, %v126
    %v130 = vtanh.pop %v129
    %vm131 = vcmask 122880
    %132 = vst.msk [vmem:[#allocation2] sm:$0x1] %vm131, %v130
    %v134 = vsel %vm55, %v130, 0
    %136 = vmatprep.subr.mxu0 0.0
    %137 = vmatpush1.msra.mxu0 0.0
    %138 = vmatprep.subr.mxu0 0.0
    %139 = vmatpush1.msra.mxu0 0.0
    %140 = vmatprep.subr.mxu0 0.0
    %141 = vmatpush1.msra.mxu0 0.0
    %142 = vmatprep.subr.mxu0 0.0
    %143 = vmatpush1.msra.mxu0 0.0
    %144 = vmatprep.subr.mxu0 0.0
    %145 = vmatpush1.msra.mxu0 0.0
    %146 = vmatprep.subr.mxu0 0.0
    %147 = vmatpush1.msra.mxu0 0.0
    %148 = vmatprep.subr.mxu0 0.0
    %149 = vmatpush1.msra.mxu0 0.0
    %150 = vmatprep.subr.mxu0 0.0
    %151 = vmatpush1.msra.mxu0 0.0
    %152 = vmatprep.subr.mxu0 0.0
    %153 = vmatpush1.msra.mxu0 0.0
    %154 = vmatprep.subr.mxu0 0.0
    %155 = vmatpush1.msra.mxu0 0.0
    %156 = vmatprep.subr.mxu0 0.0
    %157 = vmatpush1.msra.mxu0 0.0
    %158 = vmatprep.subr.mxu0 0.0
    %159 = vmatpush1.msra.mxu0 0.0
    %160 = vmatprep.subr.mxu0 0.0
    %161 = vmatpush1.msra.mxu0 0.0
    %162 = vmatprep.subr.mxu0 0.0
    %163 = vmatpush1.msra.mxu0 0.0
    %164 = vmatprep.subr.mxu0 0.0
    %165 = vmatpush1.msra.mxu0 %v54
    %166 = vmatprep.subr.mxu0 0.0
    %167 = vmatpush1.msra.mxu0 %v53
    %168 = vmatprep.subr.mxu0 0.0
    %169 = vmatpush2.msra.mxu0 0.0
    %170 = vmatprep.subr.mxu0 0.0
    %171 = vmatpush2.msra.mxu0 0.0
    %172 = vmatprep.subr.mxu0 0.0
    %173 = vmatpush2.msra.mxu0 0.0
    %174 = vmatprep.subr.mxu0 0.0
    %175 = vmatpush2.msra.mxu0 0.0
    %176 = vmatprep.subr.mxu0 0.0
    %177 = vmatpush2.msra.mxu0 0.0
    %178 = vmatprep.subr.mxu0 0.0
    %179 = vmatpush2.msra.mxu0 0.0
    %180 = vmatprep.subr.mxu0 0.0
    %181 = vmatpush2.msra.mxu0 0.0
    %182 = vmatprep.subr.mxu0 0.0
    %183 = vmatpush2.msra.mxu0 0.0
    %184 = vmatprep.subr.mxu0 0.0
    %185 = vmatpush2.msra.mxu0 0.0
    %186 = vmatprep.subr.mxu0 0.0
    %187 = vmatpush2.msra.mxu0 0.0
    %188 = vmatprep.subr.mxu0 0.0
    %189 = vmatpush2.msra.mxu0 0.0
    %190 = vmatprep.subr.mxu0 0.0
    %191 = vmatpush2.msra.mxu0 0.0
    %192 = vmatprep.subr.mxu0 0.0
    %193 = vmatpush2.msra.mxu0 0.0
    %194 = vmatprep.subr.mxu0 0.0
    %195 = vmatpush2.msra.mxu0 0.0
    %196 = vmatprep.subr.mxu0 0.0
    %197 = vmatpush2.msra.mxu0 0.0
    %198 = vmatprep.subr.mxu0 0.0
    %199 = vmatpush2.msra.mxu0 0.0
    %200 = vmatprep.mubr.f32.mxu0 0.0
    %201 = vmatmul.mubr.f32.gmra.mxu0 %v134
    %v202 = vpop.f32.mrf.mxu0
    %v203 = vadd.f32 0.0, %v202
    %v204 = vpop.f32.mrf.mxu0
    %205 = vdwg.mxu0
    %v207 = vrot.slane %v203, 7
    %v209 = vadd.f32 %v52, %v207
    %v210 = vtanh.pop %v209
    %vm211 = vcmask 123905
    %212 = vst.msk [vmem:[#allocation2] sm:$0x2] %vm211, %v210
    %v214 = vrot.slane %v210, 1
    %v215 = vsel %vm55, %v214, 0
    %217 = vmatprep.subr.mxu0 0.0
    %218 = vmatpush1.msra.mxu0 0.0
    %219 = vmatprep.subr.mxu0 0.0
    %220 = vmatpush1.msra.mxu0 0.0
    %221 = vmatprep.subr.mxu0 0.0
    %222 = vmatpush1.msra.mxu0 0.0
    %223 = vmatprep.subr.mxu0 0.0
    %224 = vmatpush1.msra.mxu0 0.0
    %225 = vmatprep.subr.mxu0 0.0
    %226 = vmatpush1.msra.mxu0 0.0
    %227 = vmatprep.subr.mxu0 0.0
    %228 = vmatpush1.msra.mxu0 0.0
    %229 = vmatprep.subr.mxu0 0.0
    %230 = vmatpush1.msra.mxu0 0.0
    %231 = vmatprep.subr.mxu0 0.0
    %232 = vmatpush1.msra.mxu0 0.0
    %233 = vmatprep.subr.mxu0 0.0
    %234 = vmatpush1.msra.mxu0 0.0
    %235 = vmatprep.subr.mxu0 0.0
    %236 = vmatpush1.msra.mxu0 0.0
    %237 = vmatprep.subr.mxu0 0.0
    %238 = vmatpush1.msra.mxu0 0.0
    %239 = vmatprep.subr.mxu0 0.0
    %240 = vmatpush1.msra.mxu0 0.0
    %241 = vmatprep.subr.mxu0 0.0
    %242 = vmatpush1.msra.mxu0 0.0
    %243 = vmatprep.subr.mxu0 0.0
    %244 = vmatpush1.msra.mxu0 0.0
    %245 = vmatprep.subr.mxu0 0.0
    %246 = vmatpush1.msra.mxu0 %v54
    %247 = vmatprep.subr.mxu0 0.0
    %248 = vmatpush1.msra.mxu0 %v53
    %249 = vmatprep.subr.mxu0 0.0
    %250 = vmatpush2.msra.mxu0 0.0
    %251 = vmatprep.subr.mxu0 0.0
    %252 = vmatpush2.msra.mxu0 0.0
    %253 = vmatprep.subr.mxu0 0.0
    %254 = vmatpush2.msra.mxu0 0.0
    %255 = vmatprep.subr.mxu0 0.0
    %256 = vmatpush2.msra.mxu0 0.0
    %257 = vmatprep.subr.mxu0 0.0
    %258 = vmatpush2.msra.mxu0 0.0
    %259 = vmatprep.subr.mxu0 0.0
    %260 = vmatpush2.msra.mxu0 0.0
    %261 = vmatprep.subr.mxu0 0.0
    %262 = vmatpush2.msra.mxu0 0.0
    %263 = vmatprep.subr.mxu0 0.0
    %264 = vmatpush2.msra.mxu0 0.0
    %265 = vmatprep.subr.mxu0 0.0
    %266 = vmatpush2.msra.mxu0 0.0
    %267 = vmatprep.subr.mxu0 0.0
    %268 = vmatpush2.msra.mxu0 0.0
    %269 = vmatprep.subr.mxu0 0.0
    %270 = vmatpush2.msra.mxu0 0.0
    %271 = vmatprep.subr.mxu0 0.0
    %272 = vmatpush2.msra.mxu0 0.0
    %273 = vmatprep.subr.mxu0 0.0
    %274 = vmatpush2.msra.mxu0 0.0
    %275 = vmatprep.subr.mxu0 0.0
    %276 = vmatpush2.msra.mxu0 0.0
    %277 = vmatprep.subr.mxu0 0.0
    %278 = vmatpush2.msra.mxu0 0.0
    %279 = vmatprep.subr.mxu0 0.0
    %280 = vmatpush2.msra.mxu0 0.0
    %281 = vmatprep.mubr.f32.mxu0 0.0
    %282 = vmatmul.mubr.f32.gmra.mxu0 %v215
    %v283 = vpop.f32.mrf.mxu0
    %v284 = vadd.f32 0.0, %v283
    %v285 = vpop.f32.mrf.mxu0
    %286 = vdwg.mxu0
    %v288 = vrot.slane %v284, 6
    %v290 = vadd.f32 %v52, %v288
    %v291 = vtanh.pop %v290
    %vm292 = vcmask 124930
    %293 = vst.msk [vmem:[#allocation2] sm:$0x4] %vm292, %v291
    %v295 = vrot.slane %v291, 2
    %v296 = vsel %vm55, %v295, 0
    %298 = vmatprep.subr.mxu0 0.0
    %299 = vmatpush1.msra.mxu0 0.0
    %300 = vmatprep.subr.mxu0 0.0
    %301 = vmatpush1.msra.mxu0 0.0
    %302 = vmatprep.subr.mxu0 0.0
    %303 = vmatpush1.msra.mxu0 0.0
    %304 = vmatprep.subr.mxu0 0.0
    %305 = vmatpush1.msra.mxu0 0.0
    %306 = vmatprep.subr.mxu0 0.0
    %307 = vmatpush1.msra.mxu0 0.0
    %308 = vmatprep.subr.mxu0 0.0
    %309 = vmatpush1.msra.mxu0 0.0
    %310 = vmatprep.subr.mxu0 0.0
    %311 = vmatpush1.msra.mxu0 0.0
    %312 = vmatprep.subr.mxu0 0.0
    %313 = vmatpush1.msra.mxu0 0.0
    %314 = vmatprep.subr.mxu0 0.0
    %315 = vmatpush1.msra.mxu0 0.0
    %316 = vmatprep.subr.mxu0 0.0
    %317 = vmatpush1.msra.mxu0 0.0
    %318 = vmatprep.subr.mxu0 0.0
    %319 = vmatpush1.msra.mxu0 0.0
    %320 = vmatprep.subr.mxu0 0.0
    %321 = vmatpush1.msra.mxu0 0.0
    %322 = vmatprep.subr.mxu0 0.0
    %323 = vmatpush1.msra.mxu0 0.0
    %324 = vmatprep.subr.mxu0 0.0
    %325 = vmatpush1.msra.mxu0 0.0
    %326 = vmatprep.subr.mxu0 0.0
    %327 = vmatpush1.msra.mxu0 %v54
    %328 = vmatprep.subr.mxu0 0.0
    %329 = vmatpush1.msra.mxu0 %v53
    %330 = vmatprep.subr.mxu0 0.0
    %331 = vmatpush2.msra.mxu0 0.0
    %332 = vmatprep.subr.mxu0 0.0
    %333 = vmatpush2.msra.mxu0 0.0
    %334 = vmatprep.subr.mxu0 0.0
    %335 = vmatpush2.msra.mxu0 0.0
    %336 = vmatprep.subr.mxu0 0.0
    %337 = vmatpush2.msra.mxu0 0.0
    %338 = vmatprep.subr.mxu0 0.0
    %339 = vmatpush2.msra.mxu0 0.0
    %340 = vmatprep.subr.mxu0 0.0
    %341 = vmatpush2.msra.mxu0 0.0
    %342 = vmatprep.subr.mxu0 0.0
    %343 = vmatpush2.msra.mxu0 0.0
    %344 = vmatprep.subr.mxu0 0.0
    %345 = vmatpush2.msra.mxu0 0.0
    %346 = vmatprep.subr.mxu0 0.0
    %347 = vmatpush2.msra.mxu0 0.0
    %348 = vmatprep.subr.mxu0 0.0
    %349 = vmatpush2.msra.mxu0 0.0
    %350 = vmatprep.subr.mxu0 0.0
    %351 = vmatpush2.msra.mxu0 0.0
    %352 = vmatprep.subr.mxu0 0.0
    %353 = vmatpush2.msra.mxu0 0.0
    %354 = vmatprep.subr.mxu0 0.0
    %355 = vmatpush2.msra.mxu0 0.0
    %356 = vmatprep.subr.mxu0 0.0
    %357 = vmatpush2.msra.mxu0 0.0
    %358 = vmatprep.subr.mxu0 0.0
    %359 = vmatpush2.msra.mxu0 0.0
    %360 = vmatprep.subr.mxu0 0.0
    %361 = vmatpush2.msra.mxu0 0.0
    %362 = vmatprep.mubr.f32.mxu0 0.0
    %363 = vmatmul.mubr.f32.gmra.mxu0 %v296
    %v364 = vpop.f32.mrf.mxu0
    %v365 = vadd.f32 0.0, %v364
    %v366 = vpop.f32.mrf.mxu0
    %367 = vdwg.mxu0
    %v369 = vrot.slane %v365, 5
    %v371 = vadd.f32 %v52, %v369
    %v372 = vtanh.pop %v371
    %vm373 = vcmask 125955
    %374 = vst.msk [vmem:[#allocation2] sm:$0x8] %vm373, %v372
    %v376 = vrot.slane %v372, 3
    %v377 = vsel %vm55, %v376, 0
    %379 = vmatprep.subr.mxu0 0.0
    %380 = vmatpush1.msra.mxu0 0.0
    %381 = vmatprep.subr.mxu0 0.0
    %382 = vmatpush1.msra.mxu0 0.0
    %383 = vmatprep.subr.mxu0 0.0
    %384 = vmatpush1.msra.mxu0 0.0
    %385 = vmatprep.subr.mxu0 0.0
    %386 = vmatpush1.msra.mxu0 0.0
    %387 = vmatprep.subr.mxu0 0.0
    %388 = vmatpush1.msra.mxu0 0.0
    %389 = vmatprep.subr.mxu0 0.0
    %390 = vmatpush1.msra.mxu0 0.0
    %391 = vmatprep.subr.mxu0 0.0
    %392 = vmatpush1.msra.mxu0 0.0
    %393 = vmatprep.subr.mxu0 0.0
    %394 = vmatpush1.msra.mxu0 0.0
    %395 = vmatprep.subr.mxu0 0.0
    %396 = vmatpush1.msra.mxu0 0.0
    %397 = vmatprep.subr.mxu0 0.0
    %398 = vmatpush1.msra.mxu0 0.0
    %399 = vmatprep.subr.mxu0 0.0
    %400 = vmatpush1.msra.mxu0 0.0
    %401 = vmatprep.subr.mxu0 0.0
    %402 = vmatpush1.msra.mxu0 0.0
    %403 = vmatprep.subr.mxu0 0.0
    %404 = vmatpush1.msra.mxu0 0.0
    %405 = vmatprep.subr.mxu0 0.0
    %406 = vmatpush1.msra.mxu0 0.0
    %407 = vmatprep.subr.mxu0 0.0
    %408 = vmatpush1.msra.mxu0 %v54
    %409 = vmatprep.subr.mxu0 0.0
    %410 = vmatpush1.msra.mxu0 %v53
    %411 = vmatprep.subr.mxu0 0.0
    %412 = vmatpush2.msra.mxu0 0.0
    %413 = vmatprep.subr.mxu0 0.0
    %414 = vmatpush2.msra.mxu0 0.0
    %415 = vmatprep.subr.mxu0 0.0
    %416 = vmatpush2.msra.mxu0 0.0
    %417 = vmatprep.subr.mxu0 0.0
    %418 = vmatpush2.msra.mxu0 0.0
    %419 = vmatprep.subr.mxu0 0.0
    %420 = vmatpush2.msra.mxu0 0.0
    %421 = vmatprep.subr.mxu0 0.0
    %422 = vmatpush2.msra.mxu0 0.0
    %423 = vmatprep.subr.mxu0 0.0
    %424 = vmatpush2.msra.mxu0 0.0
    %425 = vmatprep.subr.mxu0 0.0
    %426 = vmatpush2.msra.mxu0 0.0
    %427 = vmatprep.subr.mxu0 0.0
    %428 = vmatpush2.msra.mxu0 0.0
    %429 = vmatprep.subr.mxu0 0.0
    %430 = vmatpush2.msra.mxu0 0.0
    %431 = vmatprep.subr.mxu0 0.0
    %432 = vmatpush2.msra.mxu0 0.0
    %433 = vmatprep.subr.mxu0 0.0
    %434 = vmatpush2.msra.mxu0 0.0
    %435 = vmatprep.subr.mxu0 0.0
    %436 = vmatpush2.msra.mxu0 0.0
    %437 = vmatprep.subr.mxu0 0.0
    %438 = vmatpush2.msra.mxu0 0.0
    %439 = vmatprep.subr.mxu0 0.0
    %440 = vmatpush2.msra.mxu0 0.0
    %441 = vmatprep.subr.mxu0 0.0
    %442 = vmatpush2.msra.mxu0 0.0
    %443 = vmatprep.mubr.f32.mxu0 0.0
    %444 = vmatmul.mubr.f32.gmra.mxu0 %v377
    %v445 = vpop.f32.mrf.mxu0
    %v446 = vadd.f32 0.0, %v445
    %v447 = vpop.f32.mrf.mxu0
    %448 = vdwg.mxu0
    %v450 = vrot.slane %v446, 4
    %v452 = vadd.f32 %v52, %v450
    %v453 = vtanh.pop %v452
    %vm454 = vcmask 126980
    %455 = vst.msk [vmem:[#allocation2] sm:$0x10] %vm454, %v453
    %v457 = vrot.slane %v453, 4
    %v458 = vsel %vm55, %v457, 0
    %460 = vmatprep.subr.mxu0 0.0
    %461 = vmatpush1.msra.mxu0 0.0
    %462 = vmatprep.subr.mxu0 0.0
    %463 = vmatpush1.msra.mxu0 0.0
    %464 = vmatprep.subr.mxu0 0.0
    %465 = vmatpush1.msra.mxu0 0.0
    %466 = vmatprep.subr.mxu0 0.0
    %467 = vmatpush1.msra.mxu0 0.0
    %468 = vmatprep.subr.mxu0 0.0
    %469 = vmatpush1.msra.mxu0 0.0
    %470 = vmatprep.subr.mxu0 0.0
    %471 = vmatpush1.msra.mxu0 0.0
    %472 = vmatprep.subr.mxu0 0.0
    %473 = vmatpush1.msra.mxu0 0.0
    %474 = vmatprep.subr.mxu0 0.0
    %475 = vmatpush1.msra.mxu0 0.0
    %476 = vmatprep.subr.mxu0 0.0
    %477 = vmatpush1.msra.mxu0 0.0
    %478 = vmatprep.subr.mxu0 0.0
    %479 = vmatpush1.msra.mxu0 0.0
    %480 = vmatprep.subr.mxu0 0.0
    %481 = vmatpush1.msra.mxu0 0.0
    %482 = vmatprep.subr.mxu0 0.0
    %483 = vmatpush1.msra.mxu0 0.0
    %484 = vmatprep.subr.mxu0 0.0
    %485 = vmatpush1.msra.mxu0 0.0
    %486 = vmatprep.subr.mxu0 0.0
    %487 = vmatpush1.msra.mxu0 0.0
    %488 = vmatprep.subr.mxu0 0.0
    %489 = vmatpush1.msra.mxu0 %v54
    %490 = vmatprep.subr.mxu0 0.0
    %491 = vmatpush1.msra.mxu0 %v53
    %492 = vmatprep.subr.mxu0 0.0
    %493 = vmatpush2.msra.mxu0 0.0
    %494 = vmatprep.subr.mxu0 0.0
    %495 = vmatpush2.msra.mxu0 0.0
    %496 = vmatprep.subr.mxu0 0.0
    %497 = vmatpush2.msra.mxu0 0.0
    %498 = vmatprep.subr.mxu0 0.0
    %499 = vmatpush2.msra.mxu0 0.0
    %500 = vmatprep.subr.mxu0 0.0
    %501 = vmatpush2.msra.mxu0 0.0
    %502 = vmatprep.subr.mxu0 0.0
    %503 = vmatpush2.msra.mxu0 0.0
    %504 = vmatprep.subr.mxu0 0.0
    %505 = vmatpush2.msra.mxu0 0.0
    %506 = vmatprep.subr.mxu0 0.0
    %507 = vmatpush2.msra.mxu0 0.0
    %508 = vmatprep.subr.mxu0 0.0
    %509 = vmatpush2.msra.mxu0 0.0
    %510 = vmatprep.subr.mxu0 0.0
    %511 = vmatpush2.msra.mxu0 0.0
    %512 = vmatprep.subr.mxu0 0.0
    %513 = vmatpush2.msra.mxu0 0.0
    %514 = vmatprep.subr.mxu0 0.0
    %515 = vmatpush2.msra.mxu0 0.0
    %516 = vmatprep.subr.mxu0 0.0
    %517 = vmatpush2.msra.mxu0 0.0
    %518 = vmatprep.subr.mxu0 0.0
    %519 = vmatpush2.msra.mxu0 0.0
    %520 = vmatprep.subr.mxu0 0.0
    %521 = vmatpush2.msra.mxu0 0.0
    %522 = vmatprep.subr.mxu0 0.0
    %523 = vmatpush2.msra.mxu0 0.0
    %524 = vmatprep.mubr.f32.mxu0 0.0
    %525 = vmatmul.mubr.f32.gmra.mxu0 %v458
    %v526 = vpop.f32.mrf.mxu0
    %v527 = vadd.f32 0.0, %v526
    %v528 = vpop.f32.mrf.mxu0
    %529 = vdwg.mxu0
    %v531 = vrot.slane %v527, 3
    %v533 = vadd.f32 %v52, %v531
    %v534 = vtanh.pop %v533
    %vm535 = vcmask 128005
    %536 = vst.msk [vmem:[#allocation2] sm:$0x20] %vm535, %v534
    %v538 = vrot.slane %v534, 5
    %v539 = vsel %vm55, %v538, 0
    %541 = vmatprep.subr.mxu0 0.0
    %542 = vmatpush1.msra.mxu0 0.0
    %543 = vmatprep.subr.mxu0 0.0
    %544 = vmatpush1.msra.mxu0 0.0
    %545 = vmatprep.subr.mxu0 0.0
    %546 = vmatpush1.msra.mxu0 0.0
    %547 = vmatprep.subr.mxu0 0.0
    %548 = vmatpush1.msra.mxu0 0.0
    %549 = vmatprep.subr.mxu0 0.0
    %550 = vmatpush1.msra.mxu0 0.0
    %551 = vmatprep.subr.mxu0 0.0
    %552 = vmatpush1.msra.mxu0 0.0
    %553 = vmatprep.subr.mxu0 0.0
    %554 = vmatpush1.msra.mxu0 0.0
    %555 = vmatprep.subr.mxu0 0.0
    %556 = vmatpush1.msra.mxu0 0.0
    %557 = vmatprep.subr.mxu0 0.0
    %558 = vmatpush1.msra.mxu0 0.0
    %559 = vmatprep.subr.mxu0 0.0
    %560 = vmatpush1.msra.mxu0 0.0
    %561 = vmatprep.subr.mxu0 0.0
    %562 = vmatpush1.msra.mxu0 0.0
    %563 = vmatprep.subr.mxu0 0.0
    %564 = vmatpush1.msra.mxu0 0.0
    %565 = vmatprep.subr.mxu0 0.0
    %566 = vmatpush1.msra.mxu0 0.0
    %567 = vmatprep.subr.mxu0 0.0
    %568 = vmatpush1.msra.mxu0 0.0
    %569 = vmatprep.subr.mxu0 0.0
    %570 = vmatpush1.msra.mxu0 %v54
    %571 = vmatprep.subr.mxu0 0.0
    %572 = vmatpush1.msra.mxu0 %v53
    %573 = vmatprep.subr.mxu0 0.0
    %574 = vmatpush2.msra.mxu0 0.0
    %575 = vmatprep.subr.mxu0 0.0
    %576 = vmatpush2.msra.mxu0 0.0
    %577 = vmatprep.subr.mxu0 0.0
    %578 = vmatpush2.msra.mxu0 0.0
    %579 = vmatprep.subr.mxu0 0.0
    %580 = vmatpush2.msra.mxu0 0.0
    %581 = vmatprep.subr.mxu0 0.0
    %582 = vmatpush2.msra.mxu0 0.0
    %583 = vmatprep.subr.mxu0 0.0
    %584 = vmatpush2.msra.mxu0 0.0
    %585 = vmatprep.subr.mxu0 0.0
    %586 = vmatpush2.msra.mxu0 0.0
    %587 = vmatprep.subr.mxu0 0.0
    %588 = vmatpush2.msra.mxu0 0.0
    %589 = vmatprep.subr.mxu0 0.0
    %590 = vmatpush2.msra.mxu0 0.0
    %591 = vmatprep.subr.mxu0 0.0
    %592 = vmatpush2.msra.mxu0 0.0
    %593 = vmatprep.subr.mxu0 0.0
    %594 = vmatpush2.msra.mxu0 0.0
    %595 = vmatprep.subr.mxu0 0.0
    %596 = vmatpush2.msra.mxu0 0.0
    %597 = vmatprep.subr.mxu0 0.0
    %598 = vmatpush2.msra.mxu0 0.0
    %599 = vmatprep.subr.mxu0 0.0
    %600 = vmatpush2.msra.mxu0 0.0
    %601 = vmatprep.subr.mxu0 0.0
    %602 = vmatpush2.msra.mxu0 0.0
    %603 = vmatprep.subr.mxu0 0.0
    %604 = vmatpush2.msra.mxu0 0.0
    %605 = vmatprep.mubr.f32.mxu0 0.0
    %606 = vmatmul.mubr.f32.gmra.mxu0 %v539
    %v607 = vpop.f32.mrf.mxu0
    %v608 = vadd.f32 0.0, %v607
    %v609 = vpop.f32.mrf.mxu0
    %610 = vdwg.mxu0
    %v612 = vrot.slane %v608, 2
    %v614 = vadd.f32 %v52, %v612
    %v615 = vtanh.pop %v614
    %vm616 = vcmask 129030
    %617 = vst.msk [vmem:[#allocation2] sm:$0x40] %vm616, %v615
    %v619 = vrot.slane %v615, 6
    %v620 = vsel %vm55, %v619, 0
    %622 = vmatprep.subr.mxu0 0.0
    %623 = vmatpush1.msra.mxu0 0.0
    %624 = vmatprep.subr.mxu0 0.0
    %625 = vmatpush1.msra.mxu0 0.0
    %626 = vmatprep.subr.mxu0 0.0
    %627 = vmatpush1.msra.mxu0 0.0
    %628 = vmatprep.subr.mxu0 0.0
    %629 = vmatpush1.msra.mxu0 0.0
    %630 = vmatprep.subr.mxu0 0.0
    %631 = vmatpush1.msra.mxu0 0.0
    %632 = vmatprep.subr.mxu0 0.0
    %633 = vmatpush1.msra.mxu0 0.0
    %634 = vmatprep.subr.mxu0 0.0
    %635 = vmatpush1.msra.mxu0 0.0
    %636 = vmatprep.subr.mxu0 0.0
    %637 = vmatpush1.msra.mxu0 0.0
    %638 = vmatprep.subr.mxu0 0.0
    %639 = vmatpush1.msra.mxu0 0.0
    %640 = vmatprep.subr.mxu0 0.0
    %641 = vmatpush1.msra.mxu0 0.0
    %642 = vmatprep.subr.mxu0 0.0
    %643 = vmatpush1.msra.mxu0 0.0
    %644 = vmatprep.subr.mxu0 0.0
    %645 = vmatpush1.msra.mxu0 0.0
    %646 = vmatprep.subr.mxu0 0.0
    %647 = vmatpush1.msra.mxu0 0.0
    %648 = vmatprep.subr.mxu0 0.0
    %649 = vmatpush1.msra.mxu0 0.0
    %650 = vmatprep.subr.mxu0 0.0
    %651 = vmatpush1.msra.mxu0 %v54
    %652 = vmatprep.subr.mxu0 0.0
    %653 = vmatpush1.msra.mxu0 %v53
    %654 = vmatprep.subr.mxu0 0.0
    %655 = vmatpush2.msra.mxu0 0.0
    %656 = vmatprep.subr.mxu0 0.0
    %657 = vmatpush2.msra.mxu0 0.0
    %658 = vmatprep.subr.mxu0 0.0
    %659 = vmatpush2.msra.mxu0 0.0
    %660 = vmatprep.subr.mxu0 0.0
    %661 = vmatpush2.msra.mxu0 0.0
    %662 = vmatprep.subr.mxu0 0.0
    %663 = vmatpush2.msra.mxu0 0.0
    %664 = vmatprep.subr.mxu0 0.0
    %665 = vmatpush2.msra.mxu0 0.0
    %666 = vmatprep.subr.mxu0 0.0
    %667 = vmatpush2.msra.mxu0 0.0
    %668 = vmatprep.subr.mxu0 0.0
    %669 = vmatpush2.msra.mxu0 0.0
    %670 = vmatprep.subr.mxu0 0.0
    %671 = vmatpush2.msra.mxu0 0.0
    %672 = vmatprep.subr.mxu0 0.0
    %673 = vmatpush2.msra.mxu0 0.0
    %674 = vmatprep.subr.mxu0 0.0
    %675 = vmatpush2.msra.mxu0 0.0
    %676 = vmatprep.subr.mxu0 0.0
    %677 = vmatpush2.msra.mxu0 0.0
    %678 = vmatprep.subr.mxu0 0.0
    %679 = vmatpush2.msra.mxu0 0.0
    %680 = vmatprep.subr.mxu0 0.0
    %681 = vmatpush2.msra.mxu0 0.0
    %682 = vmatprep.subr.mxu0 0.0
    %683 = vmatpush2.msra.mxu0 0.0
    %684 = vmatprep.subr.mxu0 0.0
    %685 = vmatpush2.msra.mxu0 0.0
    %686 = vmatprep.mubr.f32.mxu0 0.0
    %687 = vmatmul.mubr.f32.gmra.mxu0 %v620
    %v688 = vpop.f32.mrf.mxu0
    %v689 = vadd.f32 0.0, %v688
    %v690 = vpop.f32.mrf.mxu0
    %691 = vdwg.mxu0
    %v693 = vrot.slane %v689, 1
    %v695 = vadd.f32 %v52, %v693
    %v696 = vtanh.pop %v695
    %vm697 = vcmask 130055
    %698 = vst.msk [vmem:[#allocation2] sm:$0x80] %vm697, %v696
    %699 = vst.msk [vmem:[#allocation8 - $0x7] sm:$0x80] %vm697, %v696
    %v700 = vld [vmem:[#allocation2] sm:$0xff]
    %s701 = sld [smem:[#allocation3]]
    %v702 = vstv %s701
    %v703 = vrot.slane %v36, 3
    %v704 = vsel %vm55, %v703, 0
    %v707 = vsel %vm55, %v700, 0
    %709 = vmatprep.subr.mxu0 0.0
    %710 = vmatpush1.xpose.msra.mxu0 0.0
    %711 = vmatprep.subr.mxu0 0.0
    %712 = vmatpush1.xpose.msra.mxu0 0.0
    %713 = vmatprep.subr.mxu0 0.0
    %714 = vmatpush1.xpose.msra.mxu0 0.0
    %715 = vmatprep.subr.mxu0 0.0
    %716 = vmatpush1.xpose.msra.mxu0 0.0
    %717 = vmatprep.subr.mxu0 0.0
    %718 = vmatpush1.xpose.msra.mxu0 0.0
    %719 = vmatprep.subr.mxu0 0.0
    %720 = vmatpush1.xpose.msra.mxu0 0.0
    %721 = vmatprep.subr.mxu0 0.0
    %722 = vmatpush1.xpose.msra.mxu0 0.0
    %723 = vmatprep.subr.mxu0 0.0
    %724 = vmatpush1.xpose.msra.mxu0 0.0
    %725 = vmatprep.subr.mxu0 0.0
    %726 = vmatpush1.xpose.msra.mxu0 0.0
    %727 = vmatprep.subr.mxu0 0.0
    %728 = vmatpush1.xpose.msra.mxu0 0.0
    %729 = vmatprep.subr.mxu0 0.0
    %730 = vmatpush1.xpose.msra.mxu0 0.0
    %731 = vmatprep.subr.mxu0 0.0
    %732 = vmatpush1.xpose.msra.mxu0 0.0
    %733 = vmatprep.subr.mxu0 0.0
    %734 = vmatpush1.xpose.msra.mxu0 0.0
    %735 = vmatprep.subr.mxu0 0.0
    %736 = vmatpush1.xpose.msra.mxu0 0.0
    %737 = vmatprep.subr.mxu0 0.0
    %738 = vmatpush1.xpose.msra.mxu0 0.0
    %739 = vmatprep.subr.mxu0 0.0
    %740 = vmatpush1.xpose.msra.mxu0 %v707
    %741 = vmatprep.subr.mxu0 0.0
    %742 = vmatpush2.xpose.msra.mxu0 0.0
    %743 = vmatprep.subr.mxu0 0.0
    %744 = vmatpush2.xpose.msra.mxu0 0.0
    %745 = vmatprep.subr.mxu0 0.0
    %746 = vmatpush2.xpose.msra.mxu0 0.0
    %747 = vmatprep.subr.mxu0 0.0
    %748 = vmatpush2.xpose.msra.mxu0 0.0
    %749 = vmatprep.subr.mxu0 0.0
    %750 = vmatpush2.xpose.msra.mxu0 0.0
    %751 = vmatprep.subr.mxu0 0.0
    %752 = vmatpush2.xpose.msra.mxu0 0.0
    %753 = vmatprep.subr.mxu0 0.0
    %754 = vmatpush2.xpose.msra.mxu0 0.0
    %755 = vmatprep.subr.mxu0 0.0
    %756 = vmatpush2.xpose.msra.mxu0 0.0
    %757 = vmatprep.subr.mxu0 0.0
    %758 = vmatpush2.xpose.msra.mxu0 0.0
    %759 = vmatprep.subr.mxu0 0.0
    %760 = vmatpush2.xpose.msra.mxu0 0.0
    %761 = vmatprep.subr.mxu0 0.0
    %762 = vmatpush2.xpose.msra.mxu0 0.0
    %763 = vmatprep.subr.mxu0 0.0
    %764 = vmatpush2.xpose.msra.mxu0 0.0
    %765 = vmatprep.subr.mxu0 0.0
    %766 = vmatpush2.xpose.msra.mxu0 0.0
    %767 = vmatprep.subr.mxu0 0.0
    %768 = vmatpush2.xpose.msra.mxu0 0.0
    %769 = vmatprep.subr.mxu0 0.0
    %770 = vmatpush2.xpose.msra.mxu0 0.0
    %771 = vmatprep.subr.mxu0 0.0
    %772 = vmatpush2.xpose.msra.mxu0 0.0
    %773 = vmatprep.mubr.f32.mxu0 0.0
    %774 = vmatmul.mubr.f32.gmra.mxu0 %v704
    %v775 = vpop.f32.mrf.mxu0
    %v776 = vadd.f32 %v702, %v775
    %v777 = vpop.f32.mrf.mxu0
    %778 = vdwg.mxu0
    %vm779 = vcmask 57344
    %780 = vst.msk [vmem:[#allocation7] sm:$0x1] %vm779, %v776
    // Predicated region
    $region22: #{tpu_custom_call.1} parent=1 // pred_check
      _
    $region23: #{tpu_custom_call.1} parent=1 // pred_check_branch
      %782 = sbr.rel (0) target = $region25
    $region24: #{tpu_custom_call.1} parent=1 // pred_region
      %s784 = ssub.s32 16, 16
      %785 = vsyncadd [#allocation6], %s784
      %s787 = sshll.u32 [#allocation7], 4
      %s788 = int_to_ptr.vmem [resolvable:$true] %s787
      %790 = dma.vmem_to_hbm [thread:$0]  %s788, 16, %s4, [#allocation6]
    $region25: #{tpu_custom_call.1} parent=1 // pred_fallthru
      _
    // Predicated region
    $region26: #{tpu_custom_call.1} parent=1 // pred_check
      _
    $region27: #{tpu_custom_call.1} parent=1 // pred_check_branch
      %792 = sbr.rel (0) target = $region29
    $region28: #{tpu_custom_call.1} parent=1 // pred_region
      %s794 = ssub.s32 16, 16
      %795 = vsyncadd [#allocation9], %s794
      %s797 = sshll.u32 [#allocation8], 4
      %s798 = int_to_ptr.vmem [resolvable:$true] %s797
      %800 = dma.vmem_to_hbm [thread:$0]  %s798, 16, %s5, [#allocation9]
    $region29: #{tpu_custom_call.1} parent=1 // pred_fallthru
      _
    // Predicated region
    $region30: #{tpu_custom_call.1} parent=1 // pred_check
      _
    $region31: #{tpu_custom_call.1} parent=1 // pred_check_branch
      %802 = sbr.rel (0) target = $region33
    $region32: #{tpu_custom_call.1} parent=1 // pred_region
      %803 = dma.done [#allocation6], 16
    $region33: #{tpu_custom_call.1} parent=1 // pred_fallthru
      _
    // Predicated region
    $region34: #{tpu_custom_call.1} parent=1 // pred_check
      _
    $region35: #{tpu_custom_call.1} parent=1 // pred_check_branch
      %805 = sbr.rel (0) target = $region37
    $region36: #{tpu_custom_call.1} parent=1 // pred_region
      %806 = dma.done [#allocation9], 16
    $region37: #{tpu_custom_call.1} parent=1 // pred_fallthru
      _
    %807 = vsyncpa [#allocation5], 1
    %808 = vsyncpa [#allocation6], 1
    %809 = vsyncpa [#allocation9], 1

</llo_original>
